<compile_context>
chip_gen: v7x
topology: tpu7x:2x2x1
jax: 0.10.0
libtpu: 0.0.40
codegen_flags: <defaults>
</compile_context>

<pallas_src>
import functools

import jax
import jax.numpy as jnp
from jax.experimental import pallas as pl
from jax.experimental.pallas import tpu as pltpu


def _round_up(a, b):
    return (a + b - 1) // b * b


def _dot_hi_lo(v, m_bf16):
    """f32-accurate row reduction as two native bf16 MXU passes.

    The reduction matrix is exact in bf16 (0.0 / 1.0 entries), so splitting the
    f32 LHS into hi + lo bf16 halves reproduces 3-pass (BF16_BF16_F32_X3)
    accuracy with only 2 MXU passes per logical dot.
    """
    hi = v.astype(jnp.bfloat16)
    lo = (v - hi.astype(jnp.float32)).astype(jnp.bfloat16)
    return (jnp.dot(hi, m_bf16, preferred_element_type=jnp.float32)
            + jnp.dot(lo, m_bf16, preferred_element_type=jnp.float32))


def _normalize_kernel(x_ref, gain_ref, bias_ref, *rest, eps, feat, use_matmul):
    if use_matmul:
        seg_ref, o_ref = rest
    else:
        (o_ref,) = rest

    x = x_ref[...].astype(jnp.float32)           # (rb, lane_w)
    g = gain_ref[...].astype(jnp.float32)        # (1, lane_w)
    b = bias_ref[...].astype(jnp.float32)        # (1, lane_w)

    inv_n = 1.0 / feat
    # torch.var default is unbiased (N-1); feat == 1 -> NaN, matching torch.
    inv_nm1 = 1.0 / (feat - 1) if feat > 1 else float("nan")

    if use_matmul:
        # Block-diagonal 0/1 "segment sum" matrix: reduce AND broadcast per
        # logical row on the MXU; every vreg / store stays lane-dense.
        m = seg_ref[...]                         # (lane_w, lane_w) bf16, exact
        mu = _dot_hi_lo(x, m) * inv_n
        diff = x - mu
        var = _dot_hi_lo(diff * diff, m) * inv_nm1
    else:
        # Wide-feature fallback: cross-lane reduce (XLU), one row per vreg row.
        mu = jnp.sum(x, axis=-1, keepdims=True) * inv_n
        diff = x - mu
        var = jnp.sum(diff * diff, axis=-1, keepdims=True) * inv_nm1

    sigma = jnp.sqrt(var + eps)
    d = sigma + eps
    r = pl.reciprocal(d, approx=True)            # EUP slot (otherwise idle)
    r = r * (2.0 - d * r)                        # one Newton step: ~6e-8 rel err
    # Padded/garbage rows in a partial last block may produce NaN here; output
    # writes are masked to valid rows, so results stay correct.
    o_ref[...] = (diff * (g * r) + b).astype(o_ref.dtype)


def normalize(x, gain, bias, *, epsilon=1e-6,
              target_block_bytes=None, vmem_limit_bytes=None):
    """Normalize over the last dim of x (PyTorch `Normalize.forward(x, dim=-1)`)."""
    orig_shape = x.shape
    feat = int(orig_shape[-1])
    rows = 1
    for d in orig_shape[:-1]:
        rows *= int(d)

    # Chip-aware defaults: 4 MiB blocks / 64 MiB limit on 128-MiB-VMEM chips
    # (v5e/v6e); 2 MiB blocks / 40 MiB limit on 64-MiB-VMEM chips (v7x), which
    # budgets for the block-sized f32 temporaries spanning the two matmuls.
    if target_block_bytes is None or vmem_limit_bytes is None:
        try:
            vmem_cap = int(pltpu.get_tpu_info().vmem_capacity_bytes)
        except Exception:
            vmem_cap = 64 * 1024 * 1024          # conservative fallback
        big_vmem = vmem_cap >= 128 * 1024 * 1024
        if target_block_bytes is None:
            target_block_bytes = (4 if big_vmem else 2) * 1024 * 1024
        if vmem_limit_bytes is None:
            vmem_limit_bytes = (64 if big_vmem else 40) * 1024 * 1024

    x2 = x.reshape(rows, feat)

    # Lane packing (free row-major reshape): fold k = 128 // feat logical rows
    # into each 128-lane vector row so stores are unmasked when feat < 128.
    if 1 < feat < 128 and 128 % feat == 0 and rows % (128 // feat) == 0:
        k = 128 // feat
    else:
        k = 1
    lane_w = k * feat
    rows_p = rows // k
    xp = x2.reshape(rows_p, lane_w)

    gain_row = jnp.asarray(gain).reshape(1, feat)
    bias_row = jnp.asarray(bias).reshape(1, feat)
    gain_p = jnp.tile(gain_row, (1, k)) if k > 1 else gain_row
    bias_p = jnp.tile(bias_row, (1, k)) if k > 1 else bias_row

    # Sublane alignment follows the dtype's native tile (8 f32 / 16 bf16 / 32 i8).
    itemsize = jnp.dtype(x.dtype).itemsize
    sub = max(8, 32 // itemsize)
    rows_p_pad = _round_up(rows_p, sub)
    units_total = rows_p_pad // sub

    # Row-block sizing: ~target_block_bytes of input per grid step.
    rb_units = max(1, (target_block_bytes // max(1, lane_w * itemsize)) // sub)
    rb_units = min(rb_units, units_total)

    # For inputs >= 1 MiB, force an even step count >= 4 so both v7x
    # TensorCores get >= 2 steps (per-core double-buffering) and v5e/v6e get a
    # real pipeline.  Tiny inputs keep a single step (no per-step overhead).
    total_bytes = rows_p * lane_w * itemsize
    if total_bytes >= (1 << 20) and units_total >= 4:
        chosen = None
        for cand in range(rb_units, 0, -1):
            steps = pl.cdiv(units_total, cand)
            if steps >= 4 and steps % 2 == 0:
                chosen = cand
                break
        if chosen is None:
            for cand in range(rb_units, 0, -1):
                if pl.cdiv(units_total, cand) >= 4:
                    chosen = cand
                    break
        if chosen is not None:
            rb_units = chosen
    row_block = rb_units * sub

    grid = (pl.cdiv(rows_p, row_block),)
    eps = float(epsilon)   # plain Python float -> no captured device constant

    # MXU segment-sum reduction for lane widths <= 256 (includes feat that
    # doesn't divide 128 via an all-ones matrix); wider features would make the
    # O(lane_w^2) matmul the bottleneck, so they keep the cross-lane reduce.
    use_matmul = lane_w <= 256

    x_spec = pl.BlockSpec((row_block, lane_w), lambda i: (i, 0))
    out_spec = pl.BlockSpec((row_block, lane_w), lambda i: (i, 0))
    # Constant index maps: Pallas DMAs these once (step 0) and never re-fetches.
    const_spec = pl.BlockSpec((1, lane_w), lambda i: (0, 0))

    kernel = functools.partial(_normalize_kernel, eps=eps, feat=feat,
                               use_matmul=use_matmul)

    if use_matmul:
        seg = jnp.arange(lane_w, dtype=jnp.int32) // feat
        seg_mat = (seg[:, None] == seg[None, :]).astype(jnp.bfloat16)  # exact 0/1
        in_specs = [x_spec, const_spec, const_spec,
                    pl.BlockSpec((lane_w, lane_w), lambda i: (0, 0))]
        args = (xp, gain_p, bias_p, seg_mat)
    else:
        in_specs = [x_spec, const_spec, const_spec]
        args = (xp, gain_p, bias_p)

    out = pl.pallas_call(
        kernel,
        out_shape=jax.ShapeDtypeStruct((rows_p, lane_w), x.dtype),
        grid_spec=pltpu.PrefetchScalarGridSpec(
            num_scalar_prefetch=0,
            grid=grid,
            in_specs=in_specs,
            out_specs=out_spec,
        ),
        compiler_params=pltpu.CompilerParams(
            dimension_semantics=("parallel",),
            vmem_limit_bytes=int(vmem_limit_bytes),
        ),
    )(*args)

    return out.reshape(orig_shape)


def _reference(x, gain, bias, epsilon=1e-6):
    # Pure-JAX reference mirroring the PyTorch forward (dim=-1).
    mu = jnp.mean(x, axis=-1, keepdims=True)
    var = jnp.var(x, axis=-1, keepdims=True, ddof=1)   # unbiased, like torch.var
    sigma = jnp.sqrt(var + epsilon)
    return gain * (x - mu) / (sigma + epsilon) + bias


if __name__ == "__main__":
    key = jax.random.PRNGKey(0)
    k_main, k_x2, k_g2, k_b2, k_x3, k_g3, k_b3 = jax.random.split(key, 7)

    # Main demo: matches the module's natural usage (features on dim=-1).
    # Exercises the lane-packed MXU segment-sum path.
    batch, seq, features = 2, 8, 32
    gain = jnp.ones((features,), dtype=jnp.float32)    # nn.Parameter(torch.ones(features))
    bias = jnp.zeros((features,), dtype=jnp.float32)   # nn.Parameter(torch.zeros(features))
    x = jax.random.normal(k_main, (batch, seq, features), dtype=jnp.float32)

    out = jax.block_until_ready(normalize(x, gain, bias, epsilon=1e-6))
    ref = _reference(x, gain, bias, 1e-6)
    assert out.shape == x.shape
    assert jnp.allclose(out, ref, atol=1e-4, rtol=1e-4), "packed path mismatch vs reference"

    # feat that does not divide 128: k == 1, still the MXU (all-ones) reduction path.
    f2 = 100
    x_b = jax.random.normal(k_x2, (3, 5, f2), dtype=jnp.float32)
    g_b = jax.random.normal(k_g2, (f2,), dtype=jnp.float32)
    b_b = jax.random.normal(k_b2, (f2,), dtype=jnp.float32)
    out_b = jax.block_until_ready(normalize(x_b, g_b, b_b, epsilon=1e-6))
    assert jnp.allclose(out_b, _reference(x_b, g_b, b_b, 1e-6), atol=1e-4, rtol=1e-4), \
        "k=1 MXU path mismatch vs reference"

    # Wide-feature fallback (lane_w > 256 -> cross-lane reduce path).
    f3 = 384
    x_c = jax.random.normal(k_x3, (2, 8, f3), dtype=jnp.float32)
    g_c = jax.random.normal(k_g3, (f3,), dtype=jnp.float32)
    b_c = jax.random.normal(k_b3, (f3,), dtype=jnp.float32)
    out_c = jax.block_until_ready(normalize(x_c, g_c, b_c, epsilon=1e-6))
    assert jnp.allclose(out_c, _reference(x_c, g_c, b_c, 1e-6), atol=1e-4, rtol=1e-4), \
        "wide-feature path mismatch vs reference"

    print("KERNEL_OK")
</pallas_src>

<mosaic_0001>
module attributes {stable_mosaic.version = 11 : i64} {
  func.func @_normalize_kernel(%arg0: i32, %arg1: memref<8x128xf32, #tpu.memory_space<vmem>>, %arg2: memref<1x128xf32, #tpu.memory_space<vmem>>, %arg3: memref<1x128xf32, #tpu.memory_space<vmem>>, %arg4: memref<128x128xbf16, #tpu.memory_space<vmem>>, %arg5: memref<8x128xf32, #tpu.memory_space<vmem>>) attributes {dimension_semantics = [#tpu.dimension_semantics<parallel>], iteration_bounds = array<i64: 1>, scalar_prefetch = 0 : i64, scratch_operands = 0 : i64, tpu.core_type = #tpu.core_type<tc>, window_params = [{transform_indices = @transform_0, window_bounds = array<i64: 8, 128>}, {pipeline_mode = #tpu.pipeline_mode<synchronous>, transform_indices = @transform_1, window_bounds = array<i64: 1, 128>}, {pipeline_mode = #tpu.pipeline_mode<synchronous>, transform_indices = @transform_2, window_bounds = array<i64: 1, 128>}, {pipeline_mode = #tpu.pipeline_mode<synchronous>, transform_indices = @transform_3, window_bounds = array<i64: 128, 128>}, {transform_indices = @transform_4, window_bounds = array<i64: 8, 128>}]} {
    %c0 = arith.constant 0 : index
    %c0_0 = arith.constant 0 : index
    %0 = vector.load %arg1[%c0, %c0_0] : memref<8x128xf32, #tpu.memory_space<vmem>>, vector<8x128xf32>
    %c0_1 = arith.constant 0 : index
    %c0_2 = arith.constant 0 : index
    %1 = vector.load %arg2[%c0_1, %c0_2] : memref<1x128xf32, #tpu.memory_space<vmem>>, vector<1x128xf32>
    %c0_3 = arith.constant 0 : index
    %c0_4 = arith.constant 0 : index
    %2 = vector.load %arg3[%c0_3, %c0_4] : memref<1x128xf32, #tpu.memory_space<vmem>>, vector<1x128xf32>
    %c0_5 = arith.constant 0 : index
    %c0_6 = arith.constant 0 : index
    %3 = vector.load %arg4[%c0_5, %c0_6] : memref<128x128xbf16, #tpu.memory_space<vmem>>, vector<128x128xbf16>
    %4 = arith.truncf %0 : vector<8x128xf32> to vector<8x128xbf16>
    %5 = arith.extf %4 : vector<8x128xbf16> to vector<8x128xf32>
    %6 = arith.subf %0, %5 : vector<8x128xf32>
    %7 = arith.truncf %6 : vector<8x128xf32> to vector<8x128xbf16>
    %cst = arith.constant dense<0.000000e+00> : vector<8x128xf32>
    %8 = tpu.matmul %4, %3, %cst {dimension_numbers = #tpu.dot_dimension_numbers<[1], [0], [0], [1], [0, 0, 1, 1], [], []>} : vector<8x128xbf16>, vector<128x128xbf16>, vector<8x128xf32> -> vector<8x128xf32>
    %cst_7 = arith.constant dense<0.000000e+00> : vector<8x128xf32>
    %9 = tpu.matmul %7, %3, %cst_7 {dimension_numbers = #tpu.dot_dimension_numbers<[1], [0], [0], [1], [0, 0, 1, 1], [], []>} : vector<8x128xbf16>, vector<128x128xbf16>, vector<8x128xf32> -> vector<8x128xf32>
    %10 = arith.addf %8, %9 : vector<8x128xf32>
    %cst_8 = arith.constant 3.125000e-02 : f32
    %11 = vector.broadcast %cst_8 : f32 to vector<8x128xf32>
    %12 = arith.mulf %10, %11 : vector<8x128xf32>
    %13 = arith.subf %0, %12 : vector<8x128xf32>
    %14 = arith.mulf %13, %13 : vector<8x128xf32>
    %15 = arith.truncf %14 : vector<8x128xf32> to vector<8x128xbf16>
    %16 = arith.extf %15 : vector<8x128xbf16> to vector<8x128xf32>
    %17 = arith.subf %14, %16 : vector<8x128xf32>
    %18 = arith.truncf %17 : vector<8x128xf32> to vector<8x128xbf16>
    %cst_9 = arith.constant dense<0.000000e+00> : vector<8x128xf32>
    %19 = tpu.matmul %15, %3, %cst_9 {dimension_numbers = #tpu.dot_dimension_numbers<[1], [0], [0], [1], [0, 0, 1, 1], [], []>} : vector<8x128xbf16>, vector<128x128xbf16>, vector<8x128xf32> -> vector<8x128xf32>
    %cst_10 = arith.constant dense<0.000000e+00> : vector<8x128xf32>
    %20 = tpu.matmul %18, %3, %cst_10 {dimension_numbers = #tpu.dot_dimension_numbers<[1], [0], [0], [1], [0, 0, 1, 1], [], []>} : vector<8x128xbf16>, vector<128x128xbf16>, vector<8x128xf32> -> vector<8x128xf32>
    %21 = arith.addf %19, %20 : vector<8x128xf32>
    %cst_11 = arith.constant 0.0322580636 : f32
    %22 = vector.broadcast %cst_11 : f32 to vector<8x128xf32>
    %23 = arith.mulf %21, %22 : vector<8x128xf32>
    %cst_12 = arith.constant 9.99999997E-7 : f32
    %24 = vector.broadcast %cst_12 : f32 to vector<8x128xf32>
    %25 = arith.addf %23, %24 : vector<8x128xf32>
    %26 = math.sqrt %25 : vector<8x128xf32>
    %cst_13 = arith.constant 9.99999997E-7 : f32
    %27 = vector.broadcast %cst_13 : f32 to vector<8x128xf32>
    %28 = arith.addf %26, %27 : vector<8x128xf32>
    %29 = tpu.reciprocal %28 {approx = true} : vector<8x128xf32> -> vector<8x128xf32>
    %30 = arith.mulf %28, %29 : vector<8x128xf32>
    %cst_14 = arith.constant 2.000000e+00 : f32
    %31 = vector.broadcast %cst_14 : f32 to vector<8x128xf32>
    %32 = arith.subf %31, %30 : vector<8x128xf32>
    %33 = arith.mulf %29, %32 : vector<8x128xf32>
    %34 = vector.broadcast %1 : vector<1x128xf32> to vector<8x128xf32>
    %35 = arith.mulf %34, %33 : vector<8x128xf32>
    %36 = arith.mulf %13, %35 : vector<8x128xf32>
    %37 = vector.broadcast %2 : vector<1x128xf32> to vector<8x128xf32>
    %38 = arith.addf %36, %37 : vector<8x128xf32>
    %c0_15 = arith.constant 0 : index
    %c0_16 = arith.constant 0 : index
    %39 = vector.load %arg5[%c0_15, %c0_16] : memref<8x128xf32, #tpu.memory_space<vmem>>, vector<8x128xf32>
    tpu.vector_store %arg5[%c0_15, %c0_16], %38 {strides = array<i32>} : memref<8x128xf32, #tpu.memory_space<vmem>>, vector<8x128xf32>,
    return
  }
  func.func @transform_0(%arg0: i32) -> (i32, i32) {
    %c0_i32 = arith.constant 0 : i32
    %c0_i32_0 = arith.constant 0 : i32
    return %arg0, %c0_i32 : i32, i32
  }
  func.func @transform_1(%arg0: i32) -> (i32, i32) {
    %c0_i32 = arith.constant 0 : i32
    %c0_i32_0 = arith.constant 0 : i32
    %c0_i32_1 = arith.constant 0 : i32
    return %c0_i32, %c0_i32_0 : i32, i32
  }
  func.func @transform_2(%arg0: i32) -> (i32, i32) {
    %c0_i32 = arith.constant 0 : i32
    %c0_i32_0 = arith.constant 0 : i32
    %c0_i32_1 = arith.constant 0 : i32
    return %c0_i32, %c0_i32_0 : i32, i32
  }
  func.func @transform_3(%arg0: i32) -> (i32, i32) {
    %c0_i32 = arith.constant 0 : i32
    %c0_i32_0 = arith.constant 0 : i32
    %c0_i32_1 = arith.constant 0 : i32
    return %c0_i32, %c0_i32_0 : i32, i32
  }
  func.func @transform_4(%arg0: i32) -> (i32, i32) {
    %c0_i32 = arith.constant 0 : i32
    %c0_i32_0 = arith.constant 0 : i32
    return %arg0, %c0_i32 : i32, i32
  }
}

</mosaic_0001>

<llo_original>
// kernel: tpu_custom_call.1
$region0: #{tpu_custom_call.1}
  #allocation0 [shape = 'u32[]', space=smem, size = 0x4, offset = 0x4, fixed_abs, tag = 'smem constant byte address 0x4 - core index']
  #allocation1 [shape = 'u32[144,128]{1,0:T(1,128)}', space=vmem, size = 0x12000, scoped, tag = 'internal scratch']
  %s0 = inlined_call_operand.hbm [shape: f32[4,128], index: 0, kind: input, shape index: {}]
  %s1 = inlined_call_operand.vmem [shape: f32[1,128], index: 1, kind: input, shape index: {}]
  %s2 = inlined_call_operand.vmem [shape: f32[1,128], index: 2, kind: input, shape index: {}]
  %s3 = inlined_call_operand.hbm [shape: bf16[128,128], index: 3, kind: input, shape index: {}]
  %s4 = inlined_call_operand.hbm [shape: f32[4,128], index: 4, kind: output, shape index: {}]
  %s5 = sld [smem:[#allocation0]]
  $region34: #{tpu_custom_call.1} parent=0
    _
  %s7 = ssub.s32 1, %s5
  %s8 = scalar_select 0, %s7, %s5
  $region1: #{tpu_custom_call.1} parent=0
    #allocation2 [shape = 'u8[4096]{0}', space=vmem, size = 0x1000, scoped, tag = 'input window, operand 0, single buffered']
    #allocation3 [shape = 's32[1]{0}', space=sflag, size = 0x4, scoped, tag = 'scoped memory for tpu_custom_call.1']
    #allocation4 [shape = 's32[1]{0}', space=sflag, size = 0x4, scoped, tag = 'scoped memory for tpu_custom_call.1']
    #allocation5 [shape = 'u8[32768]{0}', space=vmem, size = 0x8000, scoped, tag = 'input window, operand 3, single buffered']
    #allocation6 [shape = 's32[1]{0}', space=sflag, size = 0x4, scoped, tag = 'scoped memory for tpu_custom_call.1']
    #allocation7 [shape = 'u8[4096]{0}', space=vmem, size = 0x1000, scoped, tag = 'output window, operand 0, single buffered']
    %9 = vsyncpa [#allocation3], 0
    %10 = vsyncpa [#allocation6], 0
    %11 = vsyncpa [#allocation4], 0
    // Predicated region
    $region2: #{tpu_custom_call.1} parent=1 // pred_check
      _
    $region3: #{tpu_custom_call.1} parent=1 // pred_check_branch
      %13 = sbr.rel (0) target = $region5
    $region4: #{tpu_custom_call.1} parent=1 // pred_region
      %s15 = ssub.s32 128, 64
      %16 = vsyncadd [#allocation3], %s15
      %s17 = sshll.u32 [#allocation2], 4
      %s18 = int_to_ptr.vmem [resolvable:$true] %s17
      %23 = dma.hbm_to_vmem [thread:$0]  %s0, 64, %s18, [#allocation3], 64, 64, 4
    $region5: #{tpu_custom_call.1} parent=1 // pred_fallthru
      _
    // Predicated region
    $region6: #{tpu_custom_call.1} parent=1 // pred_check
      _
    $region7: #{tpu_custom_call.1} parent=1 // pred_check_branch
      %25 = sbr.rel (0) target = $region9
    $region8: #{tpu_custom_call.1} parent=1 // pred_region
      _
    $region9: #{tpu_custom_call.1} parent=1 // pred_fallthru
      _
    // Predicated region
    $region10: #{tpu_custom_call.1} parent=1 // pred_check
      _
    $region11: #{tpu_custom_call.1} parent=1 // pred_check_branch
      %27 = sbr.rel (0) target = $region13
    $region12: #{tpu_custom_call.1} parent=1 // pred_region
      _
    $region13: #{tpu_custom_call.1} parent=1 // pred_fallthru
      _
    // Predicated region
    $region14: #{tpu_custom_call.1} parent=1 // pred_check
      _
    $region15: #{tpu_custom_call.1} parent=1 // pred_check_branch
      %29 = sbr.rel (0) target = $region17
    $region16: #{tpu_custom_call.1} parent=1 // pred_region
      %s31 = ssub.s32 1024, 1024
      %32 = vsyncadd [#allocation6], %s31
      %s33 = sshll.u32 [#allocation5], 4
      %s34 = int_to_ptr.vmem [resolvable:$true] %s33
      %39 = dma.hbm_to_vmem [thread:$0]  %s3, 1024, %s34, [#allocation6], 64, 64, 4
    $region17: #{tpu_custom_call.1} parent=1 // pred_fallthru
      _
    // Predicated region
    $region18: #{tpu_custom_call.1} parent=1 // pred_check
      _
    $region19: #{tpu_custom_call.1} parent=1 // pred_check_branch
      %41 = sbr.rel (0) target = $region21
    $region20: #{tpu_custom_call.1} parent=1 // pred_region
      %42 = dma.done [#allocation3], 128
    $region21: #{tpu_custom_call.1} parent=1 // pred_fallthru
      _
    // Predicated region
    $region22: #{tpu_custom_call.1} parent=1 // pred_check
      _
    $region23: #{tpu_custom_call.1} parent=1 // pred_check_branch
      %44 = sbr.rel (0) target = $region25
    $region24: #{tpu_custom_call.1} parent=1 // pred_region
      %45 = dma.done [#allocation6], 1024
    $region25: #{tpu_custom_call.1} parent=1 // pred_fallthru
      _
    %v47 = vld [vmem:[#allocation2] sm:$0xff]
    %v48 = vld [vmem:[%s1] sm:$0x1]
    %v49 = vld [vmem:[%s2] sm:$0x1]
    %v50 = vld [vmem:[#allocation5] sm:$0xf]
    %v51 = vld [vmem:[#allocation5 + $0x4] sm:$0xf]
    %v52 = vld [vmem:[#allocation5 + $0x8] sm:$0xf]
    %v53 = vld [vmem:[#allocation5 + $0xc] sm:$0xf]
    %v54 = vld [vmem:[#allocation5 + $0x10] sm:$0xf]
    %v55 = vld [vmem:[#allocation5 + $0x14] sm:$0xf]
    %v56 = vld [vmem:[#allocation5 + $0x18] sm:$0xf]
    %v57 = vld [vmem:[#allocation5 + $0x1c] sm:$0xf]
    %v58 = vld [vmem:[#allocation5 + $0x20] sm:$0xf]
    %v59 = vld [vmem:[#allocation5 + $0x24] sm:$0xf]
    %v60 = vld [vmem:[#allocation5 + $0x28] sm:$0xf]
    %v61 = vld [vmem:[#allocation5 + $0x2c] sm:$0xf]
    %v62 = vld [vmem:[#allocation5 + $0x30] sm:$0xf]
    %v63 = vld [vmem:[#allocation5 + $0x34] sm:$0xf]
    %v64 = vld [vmem:[#allocation5 + $0x38] sm:$0xf]
    %v65 = vld [vmem:[#allocation5 + $0x3c] sm:$0xf]
    %v66 = vpack.c.bf16 %v47, %v47
    %v67 = vunpack.c.l.bf16 %v66
    %v68 = vsub.f32 %v47, %v67
    %v69 = vpack.c.bf16 %v68, %v68
    %v86 = vunpack.c.l.b16 %v50
    %v87 = vunpack.c.l.b16 %v51
    %v88 = vunpack.c.l.b16 %v52
    %v89 = vunpack.c.l.b16 %v53
    %v90 = vunpack.c.l.b16 %v54
    %v91 = vunpack.c.l.b16 %v55
    %v92 = vunpack.c.l.b16 %v56
    %v93 = vunpack.c.l.b16 %v57
    %v94 = vunpack.c.l.b16 %v58
    %v95 = vunpack.c.l.b16 %v59
    %v96 = vunpack.c.l.b16 %v60
    %v97 = vunpack.c.l.b16 %v61
    %v98 = vunpack.c.l.b16 %v62
    %v99 = vunpack.c.l.b16 %v63
    %v100 = vunpack.c.l.b16 %v64
    %v101 = vunpack.c.l.b16 %v65
    %v102 = vpack.c.b16 %v87, %v86
    %v103 = vpack.c.b16 %v89, %v88
    %v104 = vpack.c.b16 %v91, %v90
    %v105 = vpack.c.b16 %v93, %v92
    %v106 = vpack.c.b16 %v95, %v94
    %v107 = vpack.c.b16 %v97, %v96
    %v108 = vpack.c.b16 %v99, %v98
    %v109 = vpack.c.b16 %v101, %v100
    %118 = vmatprep.subr.bf16.mxu0 0
    %119 = vmatpush1.bf16.msra.mxu0 %v102
    %120 = vmatprep.subr.bf16.mxu0 0
    %121 = vmatpush1.bf16.msra.mxu0 %v103
    %122 = vmatprep.subr.bf16.mxu0 0
    %123 = vmatpush1.bf16.msra.mxu0 %v104
    %124 = vmatprep.subr.bf16.mxu0 0
    %125 = vmatpush1.bf16.msra.mxu0 %v105
    %126 = vmatprep.subr.bf16.mxu0 0
    %127 = vmatpush1.bf16.msra.mxu0 %v106
    %128 = vmatprep.subr.bf16.mxu0 0
    %129 = vmatpush1.bf16.msra.mxu0 %v107
    %130 = vmatprep.subr.bf16.mxu0 0
    %131 = vmatpush1.bf16.msra.mxu0 %v108
    %132 = vmatprep.subr.bf16.mxu0 0
    %133 = vmatpush1.bf16.msra.mxu0 %v109
    %134 = vmatprep.subr.bf16.mxu0 0
    %135 = vmatpush1.bf16.msra.mxu0 0
    %136 = vmatprep.subr.bf16.mxu0 0
    %137 = vmatpush1.bf16.msra.mxu0 0
    %138 = vmatprep.subr.bf16.mxu0 0
    %139 = vmatpush1.bf16.msra.mxu0 0
    %140 = vmatprep.subr.bf16.mxu0 0
    %141 = vmatpush1.bf16.msra.mxu0 0
    %142 = vmatprep.subr.bf16.mxu0 0
    %143 = vmatpush1.bf16.msra.mxu0 0
    %144 = vmatprep.subr.bf16.mxu0 0
    %145 = vmatpush1.bf16.msra.mxu0 0
    %146 = vmatprep.subr.bf16.mxu0 0
    %147 = vmatpush1.bf16.msra.mxu0 0
    %148 = vmatprep.subr.bf16.mxu0 0
    %149 = vmatpush1.bf16.msra.mxu0 0
    %150 = vmatprep.mubr.bf16.mxu0 0
    %151 = vmatmul.mubr.bf16.gmra.mrb[0].mxu0 %v69
    %v152 = vpop.f32.mrb[0].mxu0
    %v153 = vadd.f32 0.0, %v152
    %v154 = vpop.f32.mrb[0].mxu0
    %v155 = vpop.f32.mrb[0].mxu0
    %v156 = vpop.f32.mrb[0].mxu0
    %157 = vdwg.mxu0
    %158 = vmatprep.subr.bf16.mxu0 0
    %159 = vmatpush1.bf16.msra.mxu0 %v102
    %160 = vmatprep.subr.bf16.mxu0 0
    %161 = vmatpush1.bf16.msra.mxu0 %v103
    %162 = vmatprep.subr.bf16.mxu0 0
    %163 = vmatpush1.bf16.msra.mxu0 %v104
    %164 = vmatprep.subr.bf16.mxu0 0
    %165 = vmatpush1.bf16.msra.mxu0 %v105
    %166 = vmatprep.subr.bf16.mxu0 0
    %167 = vmatpush1.bf16.msra.mxu0 %v106
    %168 = vmatprep.subr.bf16.mxu0 0
    %169 = vmatpush1.bf16.msra.mxu0 %v107
    %170 = vmatprep.subr.bf16.mxu0 0
    %171 = vmatpush1.bf16.msra.mxu0 %v108
    %172 = vmatprep.subr.bf16.mxu0 0
    %173 = vmatpush1.bf16.msra.mxu0 %v109
    %174 = vmatprep.subr.bf16.mxu0 0
    %175 = vmatpush1.bf16.msra.mxu0 0
    %176 = vmatprep.subr.bf16.mxu0 0
    %177 = vmatpush1.bf16.msra.mxu0 0
    %178 = vmatprep.subr.bf16.mxu0 0
    %179 = vmatpush1.bf16.msra.mxu0 0
    %180 = vmatprep.subr.bf16.mxu0 0
    %181 = vmatpush1.bf16.msra.mxu0 0
    %182 = vmatprep.subr.bf16.mxu0 0
    %183 = vmatpush1.bf16.msra.mxu0 0
    %184 = vmatprep.subr.bf16.mxu0 0
    %185 = vmatpush1.bf16.msra.mxu0 0
    %186 = vmatprep.subr.bf16.mxu0 0
    %187 = vmatpush1.bf16.msra.mxu0 0
    %188 = vmatprep.subr.bf16.mxu0 0
    %189 = vmatpush1.bf16.msra.mxu0 0
    %190 = vmatprep.mubr.bf16.mxu0 0
    %191 = vmatmul.mubr.bf16.gmra.mrb[0].mxu0 %v66
    %v192 = vpop.f32.mrb[0].mxu0
    %v193 = vadd.f32 %v153, %v192
    %v194 = vpop.f32.mrb[0].mxu0
    %v195 = vpop.f32.mrb[0].mxu0
    %v196 = vpop.f32.mrb[0].mxu0
    %197 = vdwg.mxu0
    %v198 = vmul.f32 %v193, 0.03125
    %v199 = vsub.f32 %v47, %v198
    %v200 = vmul.f32 %v199, %v199
    %v201 = vpack.c.bf16 %v200, %v200
    %v202 = vunpack.c.l.bf16 %v201
    %v203 = vsub.f32 %v200, %v202
    %v204 = vpack.c.bf16 %v203, %v203
    %205 = vmatprep.subr.bf16.mxu0 0
    %206 = vmatpush1.bf16.msra.mxu0 %v102
    %207 = vmatprep.subr.bf16.mxu0 0
    %208 = vmatpush1.bf16.msra.mxu0 %v103
    %209 = vmatprep.subr.bf16.mxu0 0
    %210 = vmatpush1.bf16.msra.mxu0 %v104
    %211 = vmatprep.subr.bf16.mxu0 0
    %212 = vmatpush1.bf16.msra.mxu0 %v105
    %213 = vmatprep.subr.bf16.mxu0 0
    %214 = vmatpush1.bf16.msra.mxu0 %v106
    %215 = vmatprep.subr.bf16.mxu0 0
    %216 = vmatpush1.bf16.msra.mxu0 %v107
    %217 = vmatprep.subr.bf16.mxu0 0
    %218 = vmatpush1.bf16.msra.mxu0 %v108
    %219 = vmatprep.subr.bf16.mxu0 0
    %220 = vmatpush1.bf16.msra.mxu0 %v109
    %221 = vmatprep.subr.bf16.mxu0 0
    %222 = vmatpush1.bf16.msra.mxu0 0
    %223 = vmatprep.subr.bf16.mxu0 0
    %224 = vmatpush1.bf16.msra.mxu0 0
    %225 = vmatprep.subr.bf16.mxu0 0
    %226 = vmatpush1.bf16.msra.mxu0 0
    %227 = vmatprep.subr.bf16.mxu0 0
    %228 = vmatpush1.bf16.msra.mxu0 0
    %229 = vmatprep.subr.bf16.mxu0 0
    %230 = vmatpush1.bf16.msra.mxu0 0
    %231 = vmatprep.subr.bf16.mxu0 0
    %232 = vmatpush1.bf16.msra.mxu0 0
    %233 = vmatprep.subr.bf16.mxu0 0
    %234 = vmatpush1.bf16.msra.mxu0 0
    %235 = vmatprep.subr.bf16.mxu0 0
    %236 = vmatpush1.bf16.msra.mxu0 0
    %237 = vmatprep.mubr.bf16.mxu0 0
    %238 = vmatmul.mubr.bf16.gmra.mrb[0].mxu0 %v204
    %v239 = vpop.f32.mrb[0].mxu0
    %v240 = vadd.f32 0.0, %v239
    %v241 = vpop.f32.mrb[0].mxu0
    %v242 = vpop.f32.mrb[0].mxu0
    %v243 = vpop.f32.mrb[0].mxu0
    %244 = vdwg.mxu0
    %245 = vmatprep.subr.bf16.mxu0 0
    %246 = vmatpush1.bf16.msra.mxu0 %v102
    %247 = vmatprep.subr.bf16.mxu0 0
    %248 = vmatpush1.bf16.msra.mxu0 %v103
    %249 = vmatprep.subr.bf16.mxu0 0
    %250 = vmatpush1.bf16.msra.mxu0 %v104
    %251 = vmatprep.subr.bf16.mxu0 0
    %252 = vmatpush1.bf16.msra.mxu0 %v105
    %253 = vmatprep.subr.bf16.mxu0 0
    %254 = vmatpush1.bf16.msra.mxu0 %v106
    %255 = vmatprep.subr.bf16.mxu0 0
    %256 = vmatpush1.bf16.msra.mxu0 %v107
    %257 = vmatprep.subr.bf16.mxu0 0
    %258 = vmatpush1.bf16.msra.mxu0 %v108
    %259 = vmatprep.subr.bf16.mxu0 0
    %260 = vmatpush1.bf16.msra.mxu0 %v109
    %261 = vmatprep.subr.bf16.mxu0 0
    %262 = vmatpush1.bf16.msra.mxu0 0
    %263 = vmatprep.subr.bf16.mxu0 0
    %264 = vmatpush1.bf16.msra.mxu0 0
    %265 = vmatprep.subr.bf16.mxu0 0
    %266 = vmatpush1.bf16.msra.mxu0 0
    %267 = vmatprep.subr.bf16.mxu0 0
    %268 = vmatpush1.bf16.msra.mxu0 0
    %269 = vmatprep.subr.bf16.mxu0 0
    %270 = vmatpush1.bf16.msra.mxu0 0
    %271 = vmatprep.subr.bf16.mxu0 0
    %272 = vmatpush1.bf16.msra.mxu0 0
    %273 = vmatprep.subr.bf16.mxu0 0
    %274 = vmatpush1.bf16.msra.mxu0 0
    %275 = vmatprep.subr.bf16.mxu0 0
    %276 = vmatpush1.bf16.msra.mxu0 0
    %277 = vmatprep.mubr.bf16.mxu0 0
    %278 = vmatmul.mubr.bf16.gmra.mrb[0].mxu0 %v201
    %v279 = vpop.f32.mrb[0].mxu0
    %v280 = vadd.f32 %v240, %v279
    %v281 = vpop.f32.mrb[0].mxu0
    %v282 = vpop.f32.mrb[0].mxu0
    %v283 = vpop.f32.mrb[0].mxu0
    %284 = vdwg.mxu0
    %v285 = vmul.f32 %v280, 0.032258064
    %v286 = vadd.f32 %v285, 1e-06
    %v287 = vrsqrt.pop %v286
    %v288 = vmul.f32 %v286, %v287
    %vm289 = vcmp.eq.f32.partialorder %v286, inf
    %v290 = vsel %vm289, %v286, %v288
    %vm291 = vcmp.eq.f32.partialorder %v286, 0.0
    %v292 = vand.u32 %v286, 2147483648
    %v293 = vsel %vm291, %v292, %v290
    %v294 = vadd.f32 %v293, 1e-06
    %v295 = vrcp.pop %v294
    %v296 = vmul.f32 %v294, %v295
    %v297 = vsub.f32 2.0, %v296
    %v298 = vmul.f32 %v295, %v297
    %v300 = vlaneseq
    %v301 = vshrl.u32 %v300, 7
    %v302 = vsub.s32 0, %v301
    %v303 = vrot.slane %v48, %v302
    %v305 = vmul.f32 %v303, %v298
    %v306 = vmul.f32 %v199, %v305
    %v308 = vlaneseq
    %v309 = vshrl.u32 %v308, 7
    %v310 = vsub.s32 0, %v309
    %v311 = vrot.slane %v49, %v310
    %v313 = vadd.f32 %v306, %v311
    %314 = vst [vmem:[#allocation7] sm:$0xff] %v313
    // Predicated region
    $region26: #{tpu_custom_call.1} parent=1 // pred_check
      _
    $region27: #{tpu_custom_call.1} parent=1 // pred_check_branch
      %316 = sbr.rel (0) target = $region29
    $region28: #{tpu_custom_call.1} parent=1 // pred_region
      %s318 = ssub.s32 128, 64
      %319 = vsyncadd [#allocation4], %s318
      %s320 = sshll.u32 [#allocation7], 4
      %s321 = int_to_ptr.vmem [resolvable:$true] %s320
      %326 = dma.vmem_to_hbm [thread:$0]  %s321, 64, %s4, [#allocation4], 64, 64, 4
    $region29: #{tpu_custom_call.1} parent=1 // pred_fallthru
      _
    // Predicated region
    $region30: #{tpu_custom_call.1} parent=1 // pred_check
      _
    $region31: #{tpu_custom_call.1} parent=1 // pred_check_branch
      %328 = sbr.rel (0) target = $region33
    $region32: #{tpu_custom_call.1} parent=1 // pred_region
      %329 = dma.done [#allocation4], 128
    $region33: #{tpu_custom_call.1} parent=1 // pred_fallthru
      _
    %330 = vsyncpa [#allocation3], 1
    %331 = vsyncpa [#allocation6], 1
    %332 = vsyncpa [#allocation4], 1

</llo_original>
